<compile_context>
chip_gen: v6e
topology: v6e:2x2x1
jax: 0.10.0
libtpu: 0.0.40
codegen_flags: <defaults>
</compile_context>

<pallas_src>
import jax
import jax.numpy as jnp
from jax.experimental import pallas as pl
from jax.experimental.pallas import tpu as pltpu

TEXT_DIM = 32
VISUAL_DIM = 16
ACOUSTIC_DIM = 16
MEMORY_SIZE = 8
NUM_PATHS = 6                                       # [xsl, xsa, xsv, xpv, xpa, xpl]
SCORE_W = NUM_PATHS * MEMORY_SIZE                   # 48
LN_EPS = 1e-5                                       # PyTorch nn.LayerNorm default


def _round_up(n, m):
    return ((n + m - 1) // m) * m


def _cdiv(a, b):
    return (a + b - 1) // b


def spamn_kernel(xl_ref, xa_ref, xv_ref,
                 wsl_ref, wsa_ref, wsv_ref, bs_ref, seg_ref, wo_ref, epi_ref,
                 out_ref):
    f32 = jnp.float32
    cdt = wsl_ref.dtype                      # MXU operand dtype (bf16 by default)

    xl = xl_ref[...]                         # (tile, 32) f32, reused for the residual

    # 1) fused score matmul for all 6 memory-query paths: one small dot per
    #    modality row-block, f32 accumulation, bf16 operands.
    s = (jnp.dot(xl.astype(cdt), wsl_ref[...], preferred_element_type=f32)
         + jnp.dot(xa_ref[...].astype(cdt), wsa_ref[...], preferred_element_type=f32)
         + jnp.dot(xv_ref[...].astype(cdt), wsv_ref[...], preferred_element_type=f32)
         + bs_ref[...])                      # (tile, 48)

    # 2) per-segment softmax (6 segments of MEMORY_SIZE lanes) without lane
    #    reshapes: global row-max subtraction is softmax-invariant; per-segment
    #    denominators via the hoisted block-diagonal ones matmul; denominator
    #    floor guards against a fully-underflowed segment producing NaN/inf.
    s = s - jnp.max(s, axis=-1, keepdims=True)
    e = jnp.exp(s)
    denom = jnp.dot(e.astype(cdt), seg_ref[...], preferred_element_type=f32)
    p = e * pl.reciprocal(jnp.maximum(denom, 1e-30), approx=True)

    # 3) folded (V @ fc-slice) matmul, residual with the text lanes, LayerNorm.
    epi = epi_ref[...]                       # rows: [fc bias, LN gamma, LN beta]
    lav = jnp.dot(p.astype(cdt), wo_ref[...], preferred_element_type=f32) + epi[0:1, :]
    h = lav + xl
    mean = jnp.mean(h, axis=-1, keepdims=True)
    var = jnp.mean((h - mean) ** 2, axis=-1, keepdims=True)
    h = (h - mean) * jax.lax.rsqrt(var + LN_EPS)
    # TODO(synk): output stays f32 (module semantics); a bf16 output would halve
    # the (32-lane, masked-store) HBM writeback if downstream allows it.
    out_ref[...] = (h * epi[1:2, :] + epi[2:3, :]).astype(out_ref.dtype)


def build_fused_params(params, matmul_dtype=jnp.bfloat16):
    """Parameter-only folds (pure JAX glue, done once outside the kernel)."""
    D, M = TEXT_DIM, MEMORY_SIZE
    f32 = jnp.float32

    def kT(tag):
        return (params[f"mem_{tag}"] @ params[f"wk_{tag}"] + params[f"bk_{tag}"]).T

    def vmat(tag):
        return params[f"mem_{tag}"] @ params[f"wv_{tag}"] + params[f"bv_{tag}"]

    def path(w_in, b_in, tag):
        # scores = (x_raw @ w_in + b_in) @ W_q @ K^T + b_q @ K^T
        wq, bq, kt = params[f"wq_{tag}"], params[f"bq_{tag}"], kT(tag)
        return (w_in @ wq) @ kt, ((b_in @ wq) + bq) @ kt

    eye = jnp.eye(D, dtype=f32)
    zb = jnp.zeros((1, D), f32)
    # path order matches the fc concat: [xsl, xsa, xsv, xpv, xpa, xpl]
    specs = [("l", eye, zb, "s"),
             ("a", params["wa"], params["ba"], "s"),
             ("v", params["wv_mod"], params["bv_mod"], "s"),
             ("v", params["wv_mod"], params["bv_mod"], "v"),
             ("a", params["wa"], params["ba"], "a"),
             ("l", eye, zb, "l")]
    in_dim = {"l": TEXT_DIM, "a": ACOUSTIC_DIM, "v": VISUAL_DIM}
    ws = {m: jnp.zeros((in_dim[m], SCORE_W), f32) for m in ("l", "a", "v")}
    b_score = jnp.zeros((1, SCORE_W), f32)
    for i, (mod, w_in, b_in, tag) in enumerate(specs):
        w_eff, b_eff = path(w_in, b_in, tag)
        ws[mod] = ws[mod].at[:, i * M:(i + 1) * M].set(w_eff)
        b_score = b_score.at[:, i * M:(i + 1) * M].set(b_eff)

    # fold each path's V into the matching fc row slice: (48, 32)
    v_by_tag = {t: vmat(t) for t in ("s", "l", "a", "v")}
    v_order = ["s", "s", "s", "v", "a", "l"]
    wfc = params["wfc"]
    w_out = jnp.concatenate(
        [v_by_tag[v_order[i]] @ wfc[i * D:(i + 1) * D, :] for i in range(NUM_PATHS)],
        axis=0)

    # hoisted block-diagonal ones for the per-segment softmax denominators
    r = jax.lax.broadcasted_iota(jnp.int32, (SCORE_W, SCORE_W), 0) // M
    c = jax.lax.broadcasted_iota(jnp.int32, (SCORE_W, SCORE_W), 1) // M
    seg_ones = (r == c).astype(f32)

    # consolidated f32 epilogue slab: rows = [fc bias, LN gamma, LN beta]
    epi = jnp.concatenate([params["bfc"], params["gamma"], params["beta"]], axis=0)

    cast = lambda a: a.astype(matmul_dtype)
    return (cast(ws["l"]), cast(ws["a"]), cast(ws["v"]), b_score.astype(f32),
            cast(seg_ones), cast(w_out), epi.astype(f32))


def spamn_forward(params, text, visual, acoustic, *, tile=4096,
                  matmul_dtype=jnp.bfloat16):
    B, S, D = text.shape
    assert D == TEXT_DIM
    rows = B * S

    # Three separate row streams (free reshapes of contiguous inputs) -- no
    # materialized concat/pad HBM round trip before the kernel.
    xl = text.reshape(rows, TEXT_DIM).astype(jnp.float32)
    xa = acoustic.reshape(rows, ACOUSTIC_DIM).astype(jnp.float32)
    xv = visual.reshape(rows, VISUAL_DIM).astype(jnp.float32)

    wsl, wsa, wsv, b_score, seg, w_out, epi = build_fused_params(params, matmul_dtype)

    # Row tiling: large tiles amortize the ~0.35us per-grid-step overhead; clamp
    # for tiny inputs and keep >=2 grid steps whenever possible so the "parallel"
    # row axis can be split across both v7x TensorCores.  Partial boundary blocks
    # are masked by Pallas (rows are independent), so no padding copy is needed.
    tile = max(8, min(tile, _round_up(rows, 8)))
    if rows > 8 and _cdiv(rows, tile) < 2:
        tile = _round_up(_cdiv(rows, 2), 8)
    grid = (_cdiv(rows, tile),)

    def full(a):
        return pl.BlockSpec(a.shape, lambda i, _nd=a.ndim: (0,) * _nd)

    def rowblock(width):
        return pl.BlockSpec((tile, width), lambda i: (i, 0))

    out = pl.pallas_call(
        spamn_kernel,
        out_shape=jax.ShapeDtypeStruct((rows, TEXT_DIM), jnp.float32),
        grid=grid,
        in_specs=[rowblock(TEXT_DIM), rowblock(ACOUSTIC_DIM), rowblock(VISUAL_DIM),
                  full(wsl), full(wsa), full(wsv), full(b_score),
                  full(seg), full(w_out), full(epi)],
        out_specs=rowblock(TEXT_DIM),
        compiler_params=pltpu.CompilerParams(
            dimension_semantics=("parallel",),
            # v5e scoped default is only 16 MiB; this covers tile=4096 temporaries
            # on all generations while staying under v7x's 64 MiB physical VMEM.
            vmem_limit_bytes=48 * 1024 * 1024),
    )(xl, xa, xv, wsl, wsa, wsv, b_score, seg, w_out, epi)
    return out.reshape(B, S, TEXT_DIM)


def spamn_reference(params, text, visual, acoustic):
    """Pure-JAX f32 reference mirroring the PyTorch forward (eval mode)."""
    xl = text.astype(jnp.float32)
    xa = acoustic @ params["wa"] + params["ba"]
    xv = visual @ params["wv_mod"] + params["bv_mod"]

    def mq(x, wq, bq, wk, bk, wv, bv, mem):
        q = x @ wq + bq
        k = mem @ wk + bk
        v = mem @ wv + bv
        p = jax.nn.softmax(q @ k.T, axis=-1)
        return p @ v

    xsl = mq(xl, params["wq_s"], params["bq_s"], params["wk_s"], params["bk_s"],
             params["wv_s"], params["bv_s"], params["mem_s"])
    xsa = mq(xa, params["wq_s"], params["bq_s"], params["wk_s"], params["bk_s"],
             params["wv_s"], params["bv_s"], params["mem_s"])
    xsv = mq(xv, params["wq_s"], params["bq_s"], params["wk_s"], params["bk_s"],
             params["wv_s"], params["bv_s"], params["mem_s"])
    xpl = mq(xl, params["wq_l"], params["bq_l"], params["wk_l"], params["bk_l"],
             params["wv_l"], params["bv_l"], params["mem_l"])
    xpa = mq(xa, params["wq_a"], params["bq_a"], params["wk_a"], params["bk_a"],
             params["wv_a"], params["bv_a"], params["mem_a"])
    xpv = mq(xv, params["wq_v"], params["bq_v"], params["wk_v"], params["bk_v"],
             params["wv_v"], params["bv_v"], params["mem_v"])

    lav = jnp.concatenate([xsl, xsa, xsv, xpv, xpa, xpl], axis=-1)
    lav = lav @ params["wfc"] + params["bfc"]
    h = lav + xl
    mean = jnp.mean(h, axis=-1, keepdims=True)
    var = jnp.mean((h - mean) ** 2, axis=-1, keepdims=True)
    h = (h - mean) * jax.lax.rsqrt(var + LN_EPS)
    return h * params["gamma"] + params["beta"]


def init_params(key):
    D = TEXT_DIM
    ks = jax.random.split(key, 40)   # 34 consumed below
    it = iter(ks)

    def lin(kk, fan_in, fan_out):
        return jax.random.normal(kk, (fan_in, fan_out), jnp.float32) / jnp.sqrt(fan_in)

    def bias(kk, fan_out):
        return 0.05 * jax.random.normal(kk, (1, fan_out), jnp.float32)

    p = {}
    p["wa"], p["ba"] = lin(next(it), ACOUSTIC_DIM, D), bias(next(it), D)
    p["wv_mod"], p["bv_mod"] = lin(next(it), VISUAL_DIM, D), bias(next(it), D)
    for tag in ("s", "l", "a", "v"):
        p[f"wq_{tag}"], p[f"bq_{tag}"] = lin(next(it), D, D), bias(next(it), D)
        p[f"wk_{tag}"], p[f"bk_{tag}"] = lin(next(it), D, D), bias(next(it), D)
        p[f"wv_{tag}"], p[f"bv_{tag}"] = lin(next(it), D, D), bias(next(it), D)
        p[f"mem_{tag}"] = jax.random.normal(next(it), (MEMORY_SIZE, D), jnp.float32)
    p["wfc"], p["bfc"] = lin(next(it), 6 * D, D), bias(next(it), D)
    p["gamma"] = jnp.ones((1, D), jnp.float32)
    p["beta"] = jnp.zeros((1, D), jnp.float32)
    return p


if __name__ == "__main__":
    key = jax.random.PRNGKey(0)
    kp, kt, kvi, ka = jax.random.split(key, 4)
    B, S = 2, 8

    params = init_params(kp)
    text = jax.random.normal(kt, (B, S, TEXT_DIM), jnp.float32)
    visual = jax.random.normal(kvi, (B, S, VISUAL_DIM), jnp.float32)
    acoustic = jax.random.normal(ka, (B, S, ACOUSTIC_DIM), jnp.float32)

    ref = spamn_reference(params, text, visual, acoustic)

    # 1) f32-operand variant: validates the folding / segment-softmax / LN
    #    structure tightly against the module semantics.
    out_f32 = spamn_forward(params, text, visual, acoustic,
                            matmul_dtype=jnp.float32)
    out_f32 = jax.block_until_ready(out_f32)
    assert out_f32.shape == (B, S, TEXT_DIM)
    err_f32 = float(jnp.max(jnp.abs(out_f32 - ref)))
    assert jnp.allclose(out_f32, ref, atol=5e-3, rtol=5e-3), \
        f"f32 variant mismatch vs reference (max abs err {err_f32})"

    # 2) bf16-operand variant (the performance configuration).  The unscaled
    #    attention logits (std ~6) amplify bf16 operand rounding through exp, so
    #    the tolerance is looser; structural correctness is covered by check (1).
    out_bf16 = spamn_forward(params, text, visual, acoustic,
                             matmul_dtype=jnp.bfloat16)
    out_bf16 = jax.block_until_ready(out_bf16)
    err_bf16 = float(jnp.max(jnp.abs(out_bf16 - ref)))
    assert jnp.allclose(out_bf16, ref, atol=1e-1, rtol=1e-1), \
        f"bf16 variant mismatch vs reference (max abs err {err_bf16})"

    print("KERNEL_OK")
</pallas_src>

<mosaic_0001>
module attributes {stable_mosaic.version = 11 : i64} {
  func.func @spamn_kernel(%arg0: i32, %arg1: memref<8x32xf32, #tpu.memory_space<vmem>>, %arg2: memref<8x16xf32, #tpu.memory_space<vmem>>, %arg3: memref<8x16xf32, #tpu.memory_space<vmem>>, %arg4: memref<32x48xf32, #tpu.memory_space<vmem>>, %arg5: memref<16x48xf32, #tpu.memory_space<vmem>>, %arg6: memref<16x48xf32, #tpu.memory_space<vmem>>, %arg7: memref<1x48xf32, #tpu.memory_space<vmem>>, %arg8: memref<48x48xf32, #tpu.memory_space<vmem>>, %arg9: memref<48x32xf32, #tpu.memory_space<vmem>>, %arg10: memref<3x32xf32, #tpu.memory_space<vmem>>, %arg11: memref<8x32xf32, #tpu.memory_space<vmem>>) attributes {dimension_semantics = [#tpu.dimension_semantics<parallel>], iteration_bounds = array<i64: 2>, scalar_prefetch = 0 : i64, scratch_operands = 0 : i64, tpu.core_type = #tpu.core_type<tc>, window_params = [{transform_indices = @transform_0, window_bounds = array<i64: 8, 32>}, {transform_indices = @transform_1, window_bounds = array<i64: 8, 16>}, {transform_indices = @transform_2, window_bounds = array<i64: 8, 16>}, {pipeline_mode = #tpu.pipeline_mode<synchronous>, transform_indices = @transform_3, window_bounds = array<i64: 32, 48>}, {pipeline_mode = #tpu.pipeline_mode<synchronous>, transform_indices = @transform_4, window_bounds = array<i64: 16, 48>}, {pipeline_mode = #tpu.pipeline_mode<synchronous>, transform_indices = @transform_5, window_bounds = array<i64: 16, 48>}, {pipeline_mode = #tpu.pipeline_mode<synchronous>, transform_indices = @transform_6, window_bounds = array<i64: 1, 48>}, {pipeline_mode = #tpu.pipeline_mode<synchronous>, transform_indices = @transform_7, window_bounds = array<i64: 48, 48>}, {pipeline_mode = #tpu.pipeline_mode<synchronous>, transform_indices = @transform_8, window_bounds = array<i64: 48, 32>}, {pipeline_mode = #tpu.pipeline_mode<synchronous>, transform_indices = @transform_9, window_bounds = array<i64: 3, 32>}, {transform_indices = @transform_10, window_bounds = array<i64: 8, 32>}]} {
    %c0 = arith.constant 0 : index
    %c0_0 = arith.constant 0 : index
    %0 = vector.load %arg1[%c0, %c0_0] : memref<8x32xf32, #tpu.memory_space<vmem>>, vector<8x32xf32>
    %c0_1 = arith.constant 0 : index
    %c0_2 = arith.constant 0 : index
    %1 = vector.load %arg4[%c0_1, %c0_2] : memref<32x48xf32, #tpu.memory_space<vmem>>, vector<32x48xf32>
    %cst = arith.constant dense<0.000000e+00> : vector<8x48xf32>
    %2 = tpu.matmul %0, %1, %cst {dimension_numbers = #tpu.dot_dimension_numbers<[1], [0], [0], [1], [0, 0, 1, 1], [], []>} : vector<8x32xf32>, vector<32x48xf32>, vector<8x48xf32> -> vector<8x48xf32>
    %c0_3 = arith.constant 0 : index
    %c0_4 = arith.constant 0 : index
    %3 = vector.load %arg2[%c0_3, %c0_4] : memref<8x16xf32, #tpu.memory_space<vmem>>, vector<8x16xf32>
    %c0_5 = arith.constant 0 : index
    %c0_6 = arith.constant 0 : index
    %4 = vector.load %arg5[%c0_5, %c0_6] : memref<16x48xf32, #tpu.memory_space<vmem>>, vector<16x48xf32>
    %cst_7 = arith.constant dense<0.000000e+00> : vector<8x48xf32>
    %5 = tpu.matmul %3, %4, %cst_7 {dimension_numbers = #tpu.dot_dimension_numbers<[1], [0], [0], [1], [0, 0, 1, 1], [], []>} : vector<8x16xf32>, vector<16x48xf32>, vector<8x48xf32> -> vector<8x48xf32>
    %6 = arith.addf %2, %5 : vector<8x48xf32>
    %c0_8 = arith.constant 0 : index
    %c0_9 = arith.constant 0 : index
    %7 = vector.load %arg3[%c0_8, %c0_9] : memref<8x16xf32, #tpu.memory_space<vmem>>, vector<8x16xf32>
    %c0_10 = arith.constant 0 : index
    %c0_11 = arith.constant 0 : index
    %8 = vector.load %arg6[%c0_10, %c0_11] : memref<16x48xf32, #tpu.memory_space<vmem>>, vector<16x48xf32>
    %cst_12 = arith.constant dense<0.000000e+00> : vector<8x48xf32>
    %9 = tpu.matmul %7, %8, %cst_12 {dimension_numbers = #tpu.dot_dimension_numbers<[1], [0], [0], [1], [0, 0, 1, 1], [], []>} : vector<8x16xf32>, vector<16x48xf32>, vector<8x48xf32> -> vector<8x48xf32>
    %10 = arith.addf %6, %9 : vector<8x48xf32>
    %c0_13 = arith.constant 0 : index
    %c0_14 = arith.constant 0 : index
    %11 = vector.load %arg7[%c0_13, %c0_14] : memref<1x48xf32, #tpu.memory_space<vmem>>, vector<1x48xf32>
    %12 = vector.broadcast %11 : vector<1x48xf32> to vector<8x48xf32>
    %13 = arith.addf %10, %12 : vector<8x48xf32>
    %cst_15 = arith.constant dense<0xFF800000> : vector<8xf32>
    %14 = vector.multi_reduction <maximumf>, %13, %cst_15 [1] : vector<8x48xf32> to vector<8xf32>
    %15 = vector.shape_cast %14 : vector<8xf32> to vector<8x1xf32>
    %16 = vector.broadcast %15 : vector<8x1xf32> to vector<8x48xf32>
    %17 = arith.subf %13, %16 : vector<8x48xf32>
    %18 = math.exp %17 : vector<8x48xf32>
    %c0_16 = arith.constant 0 : index
    %c0_17 = arith.constant 0 : index
    %19 = vector.load %arg8[%c0_16, %c0_17] : memref<48x48xf32, #tpu.memory_space<vmem>>, vector<48x48xf32>
    %cst_18 = arith.constant dense<0.000000e+00> : vector<8x48xf32>
    %20 = tpu.matmul %18, %19, %cst_18 {dimension_numbers = #tpu.dot_dimension_numbers<[1], [0], [0], [1], [0, 0, 1, 1], [], []>} : vector<8x48xf32>, vector<48x48xf32>, vector<8x48xf32> -> vector<8x48xf32>
    %cst_19 = arith.constant 1.000000e-30 : f32
    %21 = vector.broadcast %cst_19 : f32 to vector<8x48xf32>
    %22 = arith.maximumf %20, %21 : vector<8x48xf32>
    %23 = tpu.reciprocal %22 {approx = true} : vector<8x48xf32> -> vector<8x48xf32>
    %24 = arith.mulf %18, %23 : vector<8x48xf32>
    %c0_20 = arith.constant 0 : index
    %c0_21 = arith.constant 0 : index
    %25 = vector.load %arg10[%c0_20, %c0_21] : memref<3x32xf32, #tpu.memory_space<vmem>>, vector<3x32xf32>
    %c0_22 = arith.constant 0 : index
    %c0_23 = arith.constant 0 : index
    %26 = vector.load %arg9[%c0_22, %c0_23] : memref<48x32xf32, #tpu.memory_space<vmem>>, vector<48x32xf32>
    %cst_24 = arith.constant dense<0.000000e+00> : vector<8x32xf32>
    %27 = tpu.matmul %24, %26, %cst_24 {dimension_numbers = #tpu.dot_dimension_numbers<[1], [0], [0], [1], [0, 0, 1, 1], [], []>} : vector<8x48xf32>, vector<48x32xf32>, vector<8x32xf32> -> vector<8x32xf32>
    %28 = vector.extract_strided_slice %25 {offsets = [0, 0], sizes = [1, 32], strides = [1, 1]} : vector<3x32xf32> to vector<1x32xf32>
    %29 = vector.broadcast %28 : vector<1x32xf32> to vector<8x32xf32>
    %30 = arith.addf %27, %29 : vector<8x32xf32>
    %31 = arith.addf %30, %0 : vector<8x32xf32>
    %cst_25 = arith.constant dense<0.000000e+00> : vector<8xf32>
    %32 = vector.multi_reduction <add>, %31, %cst_25 [1] : vector<8x32xf32> to vector<8xf32>
    %33 = vector.shape_cast %32 : vector<8xf32> to vector<8x1xf32>
    %cst_26 = arith.constant 3.200000e+01 : f32
    %34 = vector.broadcast %cst_26 : f32 to vector<8x1xf32>
    %35 = arith.divf %33, %34 : vector<8x1xf32>
    %36 = vector.broadcast %35 : vector<8x1xf32> to vector<8x32xf32>
    %37 = arith.subf %31, %36 : vector<8x32xf32>
    %38 = arith.mulf %37, %37 : vector<8x32xf32>
    %cst_27 = arith.constant dense<0.000000e+00> : vector<8xf32>
    %39 = vector.multi_reduction <add>, %38, %cst_27 [1] : vector<8x32xf32> to vector<8xf32>
    %40 = vector.shape_cast %39 : vector<8xf32> to vector<8x1xf32>
    %cst_28 = arith.constant 3.200000e+01 : f32
    %41 = vector.broadcast %cst_28 : f32 to vector<8x1xf32>
    %42 = arith.divf %40, %41 : vector<8x1xf32>
    %43 = vector.broadcast %35 : vector<8x1xf32> to vector<8x32xf32>
    %44 = arith.subf %31, %43 : vector<8x32xf32>
    %cst_29 = arith.constant 9.99999974E-6 : f32
    %45 = vector.broadcast %cst_29 : f32 to vector<8x1xf32>
    %46 = arith.addf %42, %45 : vector<8x1xf32>
    %47 = math.rsqrt %46 : vector<8x1xf32>
    %48 = vector.broadcast %47 : vector<8x1xf32> to vector<8x32xf32>
    %49 = arith.mulf %44, %48 : vector<8x32xf32>
    %50 = vector.extract_strided_slice %25 {offsets = [1, 0], sizes = [1, 32], strides = [1, 1]} : vector<3x32xf32> to vector<1x32xf32>
    %51 = vector.broadcast %50 : vector<1x32xf32> to vector<8x32xf32>
    %52 = arith.mulf %49, %51 : vector<8x32xf32>
    %53 = vector.extract_strided_slice %25 {offsets = [2, 0], sizes = [1, 32], strides = [1, 1]} : vector<3x32xf32> to vector<1x32xf32>
    %54 = vector.broadcast %53 : vector<1x32xf32> to vector<8x32xf32>
    %55 = arith.addf %52, %54 : vector<8x32xf32>
    %c0_30 = arith.constant 0 : index
    %c0_31 = arith.constant 0 : index
    %56 = vector.load %arg11[%c0_30, %c0_31] : memref<8x32xf32, #tpu.memory_space<vmem>>, vector<8x32xf32>
    tpu.vector_store %arg11[%c0_30, %c0_31], %55 {strides = array<i32>} : memref<8x32xf32, #tpu.memory_space<vmem>>, vector<8x32xf32>,
    return
  }
  func.func @transform_0(%arg0: i32) -> (i32, i32) {
    %c0_i32 = arith.constant 0 : i32
    %c0_i32_0 = arith.constant 0 : i32
    return %arg0, %c0_i32 : i32, i32
  }
  func.func @transform_1(%arg0: i32) -> (i32, i32) {
    %c0_i32 = arith.constant 0 : i32
    %c0_i32_0 = arith.constant 0 : i32
    return %arg0, %c0_i32 : i32, i32
  }
  func.func @transform_2(%arg0: i32) -> (i32, i32) {
    %c0_i32 = arith.constant 0 : i32
    %c0_i32_0 = arith.constant 0 : i32
    return %arg0, %c0_i32 : i32, i32
  }
  func.func @transform_3(%arg0: i32) -> (i32, i32) {
    %c0_i32 = arith.constant 0 : i32
    %c0_i32_0 = arith.constant 0 : i32
    %c0_i32_1 = arith.constant 0 : i32
    return %c0_i32, %c0_i32_0 : i32, i32
  }
  func.func @transform_4(%arg0: i32) -> (i32, i32) {
    %c0_i32 = arith.constant 0 : i32
    %c0_i32_0 = arith.constant 0 : i32
    %c0_i32_1 = arith.constant 0 : i32
    return %c0_i32, %c0_i32_0 : i32, i32
  }
  func.func @transform_5(%arg0: i32) -> (i32, i32) {
    %c0_i32 = arith.constant 0 : i32
    %c0_i32_0 = arith.constant 0 : i32
    %c0_i32_1 = arith.constant 0 : i32
    return %c0_i32, %c0_i32_0 : i32, i32
  }
  func.func @transform_6(%arg0: i32) -> (i32, i32) {
    %c0_i32 = arith.constant 0 : i32
    %c0_i32_0 = arith.constant 0 : i32
    %c0_i32_1 = arith.constant 0 : i32
    return %c0_i32, %c0_i32_0 : i32, i32
  }
  func.func @transform_7(%arg0: i32) -> (i32, i32) {
    %c0_i32 = arith.constant 0 : i32
    %c0_i32_0 = arith.constant 0 : i32
    %c0_i32_1 = arith.constant 0 : i32
    return %c0_i32, %c0_i32_0 : i32, i32
  }
  func.func @transform_8(%arg0: i32) -> (i32, i32) {
    %c0_i32 = arith.constant 0 : i32
    %c0_i32_0 = arith.constant 0 : i32
    %c0_i32_1 = arith.constant 0 : i32
    return %c0_i32, %c0_i32_0 : i32, i32
  }
  func.func @transform_9(%arg0: i32) -> (i32, i32) {
    %c0_i32 = arith.constant 0 : i32
    %c0_i32_0 = arith.constant 0 : i32
    %c0_i32_1 = arith.constant 0 : i32
    return %c0_i32, %c0_i32_0 : i32, i32
  }
  func.func @transform_10(%arg0: i32) -> (i32, i32) {
    %c0_i32 = arith.constant 0 : i32
    %c0_i32_0 = arith.constant 0 : i32
    return %arg0, %c0_i32 : i32, i32
  }
}

</mosaic_0001>

<llo_original>
// kernel: tpu_custom_call.1
$region0: #{tpu_custom_call.1}
  #allocation0 [shape = 'u32[]', space=smem, size = 0x4, offset = 0x4, fixed_abs, tag = 'smem constant byte address 0x4 - core index']
  #allocation1 [shape = 'u32[144,128]{1,0:T(1,128)}', space=vmem, size = 0x12000, scoped, tag = 'internal scratch']
  %s0 = inlined_call_operand.hbm [shape: f32[16,32], index: 0, kind: input, shape index: {}]
  %s1 = inlined_call_operand.hbm [shape: f32[16,16], index: 1, kind: input, shape index: {}]
  %s2 = inlined_call_operand.hbm [shape: f32[16,16], index: 2, kind: input, shape index: {}]
  %s3 = inlined_call_operand.vmem [shape: f32[32,48], index: 3, kind: input, shape index: {}]
  %s4 = inlined_call_operand.hbm [shape: f32[16,48], index: 4, kind: input, shape index: {}]
  %s5 = inlined_call_operand.hbm [shape: f32[16,48], index: 5, kind: input, shape index: {}]
  %s6 = inlined_call_operand.vmem [shape: f32[1,48], index: 6, kind: input, shape index: {}]
  %s7 = inlined_call_operand.vmem [shape: f32[48,48], index: 7, kind: input, shape index: {}]
  %s8 = inlined_call_operand.vmem [shape: f32[48,32], index: 8, kind: input, shape index: {}]
  %s9 = inlined_call_operand.vmem [shape: f32[3,32], index: 9, kind: input, shape index: {}]
  %s10 = inlined_call_operand.hbm [shape: f32[16,32], index: 10, kind: output, shape index: {}]
  %s11 = sld [smem:[#allocation0]]
  $region93: #{tpu_custom_call.1} parent=0
    _
  %s13 = ssub.s32 1, %s11
  %s14 = scalar_select 0, %s13, %s11
  $region1: #{tpu_custom_call.1} parent=0
    #allocation2 [shape = 'u8[8192]{0}', space=vmem, size = 0x2000, scoped, tag = 'input window, operand 0']
    #allocation3 [shape = 's32[2]{0}', space=sflag, size = 0x8, scoped, tag = 'scoped memory for tpu_custom_call.1']
    #allocation4 [shape = 's32[2]{0}', space=sflag, size = 0x8, scoped, tag = 'scoped memory for tpu_custom_call.1']
    #allocation5 [shape = 'u8[8192]{0}', space=vmem, size = 0x2000, scoped, tag = 'input window, operand 1']
    #allocation6 [shape = 's32[2]{0}', space=sflag, size = 0x8, scoped, tag = 'scoped memory for tpu_custom_call.1']
    #allocation7 [shape = 'u8[8192]{0}', space=vmem, size = 0x2000, scoped, tag = 'input window, operand 2']
    #allocation8 [shape = 'u8[8192]{0}', space=vmem, size = 0x2000, scoped, tag = 'input window, operand 4, single buffered']
    #allocation9 [shape = 's32[1]{0}', space=sflag, size = 0x4, scoped, tag = 'scoped memory for tpu_custom_call.1']
    #allocation10 [shape = 'u8[8192]{0}', space=vmem, size = 0x2000, scoped, tag = 'input window, operand 5, single buffered']
    #allocation11 [shape = 'u8[8192]{0}', space=vmem, size = 0x2000, scoped, tag = 'output window, operand 0']
    %15 = vsyncpa [#allocation3], 0
    %s16 = scalar_lea.sflag [#allocation3], 1
    %17 = vsyncpa %s16, 0
    %18 = vsyncpa [#allocation6], 0
    %s19 = scalar_lea.sflag [#allocation6], 1
    %20 = vsyncpa %s19, 0
    %21 = vsyncpa [#allocation9], 0
    %22 = vsyncpa [#allocation4], 0
    %s23 = scalar_lea.sflag [#allocation4], 1
    %24 = vsyncpa %s23, 0
    loop: start=0, step=1, limit=4
    $region2: #{tpu_custom_call.1} parent=1 // loop_pre_header
      _
    $region3: #{tpu_custom_call.1} parent=1 // loop_header
      %s26 = sphi 0, %s30
      %p27 = scmp.ge.s32.totalorder %s26, 4
      %s36 = sphi 0, %s38
      %s39 = sphi 0, %s36
      %s40 = sphi 0, %s39
      %s56 = sphi 0, %s40
      %s62 = sphi 0, %s64
      %s65 = sphi 0, %s62
      %s66 = sphi 0, %s65
      %s82 = sphi 0, %s66
      %s88 = sphi 0, %s90
      %s91 = sphi 0, %s88
      %s92 = sphi 0, %s91
      %s108 = sphi 0, %s92
      %s112 = sphi 0, %s112
      %s114 = sphi 0, %s112
      %s115 = sphi 0, %s114
      %s129 = sphi 0, %s115
      %s133 = sphi 0, %s133
      %s135 = sphi 0, %s133
      %s136 = sphi 0, %s135
      %s150 = sphi 0, %s136
      %s154 = sphi 0, %s154
      %s156 = sphi 0, %s154
      %s157 = sphi 0, %s156
      %s171 = sphi 0, %s157
      %s175 = sphi 0, %s175
      %s177 = sphi 0, %s175
      %s178 = sphi 0, %s177
      %s192 = sphi 0, %s178
      %s196 = sphi 0, %s196
      %s198 = sphi 0, %s196
      %s199 = sphi 0, %s198
      %s213 = sphi 0, %s199
      %s217 = sphi 0, %s217
      %s219 = sphi 0, %s217
      %s220 = sphi 0, %s219
      %s234 = sphi 0, %s220
      %s238 = sphi 0, %s238
      %s240 = sphi 0, %s238
      %s241 = sphi 0, %s240
      %s255 = sphi 0, %s241
      %s261 = sphi 0, %s263
      %s264 = sphi 0, %s261
      %s265 = sphi 0, %s264
      %s281 = sphi 0, %s265
    $region4: #{tpu_custom_call.1} parent=1 // loop_header_branch
      %29 = sbr.rel (%p27) target = $region8
    $region5: #{tpu_custom_call.1} parent=1 // loop_body
      %s31 = ssub.s32 %s26, 1
      %s32 = ssub.s32 %s26, 2
      %s33 = sadd.s32 %s26, 1
      %s34 = ssub.s32 %s26, %s33
      %p35 = scmp.eq.s32.totalorder %s34, 0
      %s37 = sadd.s32 %s36, 1
      %s38 = scalar_select %p35, %s36, %s37
      %p41 = pneg %p35
      %p42 = scmp.eq.s32.totalorder %s26, 1
      %p43 = por %p41, %p42
      %p44 = scmp.ne.s32.totalorder %s36, %s39
      %p45 = scmp.eq.s32.totalorder %s26, 0
      %p46 = por %p44, %p45
      %p47 = scmp.ne.s32.totalorder %s36, %s39
      %p48 = scmp.eq.s32.totalorder %s31, 1
      %p49 = por %p47, %p48
      %p50 = scmp.ne.s32.totalorder %s39, %s40
      %p51 = scmp.eq.s32.totalorder %s31, 0
      %p52 = por %p50, %p51
      %p53 = scmp.ne.s32.totalorder %s39, %s40
      %p54 = scmp.eq.s32.totalorder %s32, 1
      %p55 = por %p53, %p54
      %p57 = scmp.ne.s32.totalorder %s40, %s56
      %p58 = scmp.eq.s32.totalorder %s32, 0
      %p59 = por %p57, %p58
      %s60 = ssub.s32 %s26, %s33
      %p61 = scmp.eq.s32.totalorder %s60, 0
      %s63 = sadd.s32 %s62, 1
      %s64 = scalar_select %p61, %s62, %s63
      %p67 = pneg %p61
      %p68 = scmp.eq.s32.totalorder %s26, 1
      %p69 = por %p67, %p68
      %p70 = scmp.ne.s32.totalorder %s62, %s65
      %p71 = scmp.eq.s32.totalorder %s26, 0
      %p72 = por %p70, %p71
      %p73 = scmp.ne.s32.totalorder %s62, %s65
      %p74 = scmp.eq.s32.totalorder %s31, 1
      %p75 = por %p73, %p74
      %p76 = scmp.ne.s32.totalorder %s65, %s66
      %p77 = scmp.eq.s32.totalorder %s31, 0
      %p78 = por %p76, %p77
      %p79 = scmp.ne.s32.totalorder %s65, %s66
      %p80 = scmp.eq.s32.totalorder %s32, 1
      %p81 = por %p79, %p80
      %p83 = scmp.ne.s32.totalorder %s66, %s82
      %p84 = scmp.eq.s32.totalorder %s32, 0
      %p85 = por %p83, %p84
      %s86 = ssub.s32 %s26, %s33
      %p87 = scmp.eq.s32.totalorder %s86, 0
      %s89 = sadd.s32 %s88, 1
      %s90 = scalar_select %p87, %s88, %s89
      %p93 = pneg %p87
      %p94 = scmp.eq.s32.totalorder %s26, 1
      %p95 = por %p93, %p94
      %p96 = scmp.ne.s32.totalorder %s88, %s91
      %p97 = scmp.eq.s32.totalorder %s26, 0
      %p98 = por %p96, %p97
      %p99 = scmp.ne.s32.totalorder %s88, %s91
      %p100 = scmp.eq.s32.totalorder %s31, 1
      %p101 = por %p99, %p100
      %p102 = scmp.ne.s32.totalorder %s91, %s92
      %p103 = scmp.eq.s32.totalorder %s31, 0
      %p104 = por %p102, %p103
      %p105 = scmp.ne.s32.totalorder %s91, %s92
      %p106 = scmp.eq.s32.totalorder %s32, 1
      %p107 = por %p105, %p106
      %p109 = scmp.ne.s32.totalorder %s92, %s108
      %p110 = scmp.eq.s32.totalorder %s32, 0
      %p111 = por %p109, %p110
      %s113 = sadd.s32 %s112, 1
      %p116 = scmp.eq.s32.totalorder %s26, 1
      %p117 = scmp.ne.s32.totalorder %s112, %s114
      %p118 = scmp.eq.s32.totalorder %s26, 0
      %p119 = por %p117, %p118
      %p120 = scmp.ne.s32.totalorder %s112, %s114
      %p121 = scmp.eq.s32.totalorder %s31, 1
      %p122 = por %p120, %p121
      %p123 = scmp.ne.s32.totalorder %s114, %s115
      %p124 = scmp.eq.s32.totalorder %s31, 0
      %p125 = por %p123, %p124
      %p126 = scmp.ne.s32.totalorder %s114, %s115
      %p127 = scmp.eq.s32.totalorder %s32, 1
      %p128 = por %p126, %p127
      %p130 = scmp.ne.s32.totalorder %s115, %s129
      %p131 = scmp.eq.s32.totalorder %s32, 0
      %p132 = por %p130, %p131
      %s134 = sadd.s32 %s133, 1
      %p137 = scmp.eq.s32.totalorder %s26, 1
      %p138 = scmp.ne.s32.totalorder %s133, %s135
      %p139 = scmp.eq.s32.totalorder %s26, 0
      %p140 = por %p138, %p139
      %p141 = scmp.ne.s32.totalorder %s133, %s135
      %p142 = scmp.eq.s32.totalorder %s31, 1
      %p143 = por %p141, %p142
      %p144 = scmp.ne.s32.totalorder %s135, %s136
      %p145 = scmp.eq.s32.totalorder %s31, 0
      %p146 = por %p144, %p145
      %p147 = scmp.ne.s32.totalorder %s135, %s136
      %p148 = scmp.eq.s32.totalorder %s32, 1
      %p149 = por %p147, %p148
      %p151 = scmp.ne.s32.totalorder %s136, %s150
      %p152 = scmp.eq.s32.totalorder %s32, 0
      %p153 = por %p151, %p152
      %s155 = sadd.s32 %s154, 1
      %p158 = scmp.eq.s32.totalorder %s26, 1
      %p159 = scmp.ne.s32.totalorder %s154, %s156
      %p160 = scmp.eq.s32.totalorder %s26, 0
      %p161 = por %p159, %p160
      %p162 = scmp.ne.s32.totalorder %s154, %s156
      %p163 = scmp.eq.s32.totalorder %s31, 1
      %p164 = por %p162, %p163
      %p165 = scmp.ne.s32.totalorder %s156, %s157
      %p166 = scmp.eq.s32.totalorder %s31, 0
      %p167 = por %p165, %p166
      %p168 = scmp.ne.s32.totalorder %s156, %s157
      %p169 = scmp.eq.s32.totalorder %s32, 1
      %p170 = por %p168, %p169
      %p172 = scmp.ne.s32.totalorder %s157, %s171
      %p173 = scmp.eq.s32.totalorder %s32, 0
      %p174 = por %p172, %p173
      %s176 = sadd.s32 %s175, 1
      %p179 = scmp.eq.s32.totalorder %s26, 1
      %p180 = scmp.ne.s32.totalorder %s175, %s177
      %p181 = scmp.eq.s32.totalorder %s26, 0
      %p182 = por %p180, %p181
      %p183 = scmp.ne.s32.totalorder %s175, %s177
      %p184 = scmp.eq.s32.totalorder %s31, 1
      %p185 = por %p183, %p184
      %p186 = scmp.ne.s32.totalorder %s177, %s178
      %p187 = scmp.eq.s32.totalorder %s31, 0
      %p188 = por %p186, %p187
      %p189 = scmp.ne.s32.totalorder %s177, %s178
      %p190 = scmp.eq.s32.totalorder %s32, 1
      %p191 = por %p189, %p190
      %p193 = scmp.ne.s32.totalorder %s178, %s192
      %p194 = scmp.eq.s32.totalorder %s32, 0
      %p195 = por %p193, %p194
      %s197 = sadd.s32 %s196, 1
      %p200 = scmp.eq.s32.totalorder %s26, 1
      %p201 = scmp.ne.s32.totalorder %s196, %s198
      %p202 = scmp.eq.s32.totalorder %s26, 0
      %p203 = por %p201, %p202
      %p204 = scmp.ne.s32.totalorder %s196, %s198
      %p205 = scmp.eq.s32.totalorder %s31, 1
      %p206 = por %p204, %p205
      %p207 = scmp.ne.s32.totalorder %s198, %s199
      %p208 = scmp.eq.s32.totalorder %s31, 0
      %p209 = por %p207, %p208
      %p210 = scmp.ne.s32.totalorder %s198, %s199
      %p211 = scmp.eq.s32.totalorder %s32, 1
      %p212 = por %p210, %p211
      %p214 = scmp.ne.s32.totalorder %s199, %s213
      %p215 = scmp.eq.s32.totalorder %s32, 0
      %p216 = por %p214, %p215
      %s218 = sadd.s32 %s217, 1
      %p221 = scmp.eq.s32.totalorder %s26, 1
      %p222 = scmp.ne.s32.totalorder %s217, %s219
      %p223 = scmp.eq.s32.totalorder %s26, 0
      %p224 = por %p222, %p223
      %p225 = scmp.ne.s32.totalorder %s217, %s219
      %p226 = scmp.eq.s32.totalorder %s31, 1
      %p227 = por %p225, %p226
      %p228 = scmp.ne.s32.totalorder %s219, %s220
      %p229 = scmp.eq.s32.totalorder %s31, 0
      %p230 = por %p228, %p229
      %p231 = scmp.ne.s32.totalorder %s219, %s220
      %p232 = scmp.eq.s32.totalorder %s32, 1
      %p233 = por %p231, %p232
      %p235 = scmp.ne.s32.totalorder %s220, %s234
      %p236 = scmp.eq.s32.totalorder %s32, 0
      %p237 = por %p235, %p236
      %s239 = sadd.s32 %s238, 1
      %p242 = scmp.eq.s32.totalorder %s26, 1
      %p243 = scmp.ne.s32.totalorder %s238, %s240
      %p244 = scmp.eq.s32.totalorder %s26, 0
      %p245 = por %p243, %p244
      %p246 = scmp.ne.s32.totalorder %s238, %s240
      %p247 = scmp.eq.s32.totalorder %s31, 1
      %p248 = por %p246, %p247
      %p249 = scmp.ne.s32.totalorder %s240, %s241
      %p250 = scmp.eq.s32.totalorder %s31, 0
      %p251 = por %p249, %p250
      %p252 = scmp.ne.s32.totalorder %s240, %s241
      %p253 = scmp.eq.s32.totalorder %s32, 1
      %p254 = por %p252, %p253
      %p256 = scmp.ne.s32.totalorder %s241, %s255
      %p257 = scmp.eq.s32.totalorder %s32, 0
      %p258 = por %p256, %p257
      %s259 = ssub.s32 %s26, %s33
      %p260 = scmp.eq.s32.totalorder %s259, 0
      %s262 = sadd.s32 %s261, 1
      %s263 = scalar_select %p260, %s261, %s262
      %p266 = pneg %p260
      %p267 = scmp.eq.s32.totalorder %s26, 1
      %p268 = por %p266, %p267
      %p269 = scmp.ne.s32.totalorder %s261, %s264
      %p270 = scmp.eq.s32.totalorder %s26, 0
      %p271 = por %p269, %p270
      %p272 = scmp.ne.s32.totalorder %s261, %s264
      %p273 = scmp.eq.s32.totalorder %s31, 1
      %p274 = por %p272, %p273
      %p275 = scmp.ne.s32.totalorder %s264, %s265
      %p276 = scmp.eq.s32.totalorder %s31, 0
      %p277 = por %p275, %p276
      %p278 = scmp.ne.s32.totalorder %s264, %s265
      %p279 = scmp.eq.s32.totalorder %s32, 1
      %p280 = por %p278, %p279
      %p282 = scmp.ne.s32.totalorder %s265, %s281
      %p283 = scmp.eq.s32.totalorder %s32, 0
      %p284 = por %p282, %p283
      %p285 = scmp.le.s32.totalorder 1, %s26
      %p286 = scmp.lt.s32.totalorder %s26, 3
      %p287 = pnand %p285, %p286
      %p288 = pneg %p287
      // Predicated region
      $region9: #{tpu_custom_call.1} parent=5 // pred_check
        _
      $region10: #{tpu_custom_call.1} parent=5 // pred_check_branch
        %290 = sbr.rel (%p287) target = $region12
      $region11: #{tpu_custom_call.1} parent=5 // pred_region
        %s291 = ssub.s32 %s26, 1
        // Predicated region
        $region13: #{tpu_custom_call.1} parent=11 // pred_check
          %p292 = pneg %p125
        $region14: #{tpu_custom_call.1} parent=11 // pred_check_branch
          %294 = sbr.rel (%p292) target = $region16
        $region15: #{tpu_custom_call.1} parent=11 // pred_region
          _
        $region16: #{tpu_custom_call.1} parent=11 // pred_fallthru
          _
        // Predicated region
        $region17: #{tpu_custom_call.1} parent=11 // pred_check
          %p295 = pneg %p146
        $region18: #{tpu_custom_call.1} parent=11 // pred_check_branch
          %297 = sbr.rel (%p295) target = $region20
        $region19: #{tpu_custom_call.1} parent=11 // pred_region
          %s299 = ssub.s32 256, 256
          %300 = vsyncadd [#allocation9], %s299
          %s301 = sshll.u32 [#allocation8], 4
          %s302 = int_to_ptr.vmem [resolvable:$true] %s301
          %307 = dma.hbm_to_vmem [thread:$0]  %s4, 256, %s302, [#allocation9], 128, 128, 8
        $region20: #{tpu_custom_call.1} parent=11 // pred_fallthru
          _
        // Predicated region
        $region21: #{tpu_custom_call.1} parent=11 // pred_check
          %p308 = pneg %p167
        $region22: #{tpu_custom_call.1} parent=11 // pred_check_branch
          %310 = sbr.rel (%p308) target = $region24
        $region23: #{tpu_custom_call.1} parent=11 // pred_region
          %s312 = ssub.s32 256, 256
          %313 = vsyncadd [#allocation9], %s312
          %s314 = sshll.u32 [#allocation10], 4
          %s315 = int_to_ptr.vmem [resolvable:$true] %s314
          %320 = dma.hbm_to_vmem [thread:$0]  %s5, 256, %s315, [#allocation9], 128, 128, 8
        $region24: #{tpu_custom_call.1} parent=11 // pred_fallthru
          _
        // Predicated region
        $region25: #{tpu_custom_call.1} parent=11 // pred_check
          %p321 = pneg %p188
        $region26: #{tpu_custom_call.1} parent=11 // pred_check_branch
          %323 = sbr.rel (%p321) target = $region28
        $region27: #{tpu_custom_call.1} parent=11 // pred_region
          _
        $region28: #{tpu_custom_call.1} parent=11 // pred_fallthru
          _
        // Predicated region
        $region29: #{tpu_custom_call.1} parent=11 // pred_check
          %p324 = pneg %p209
        $region30: #{tpu_custom_call.1} parent=11 // pred_check_branch
          %326 = sbr.rel (%p324) target = $region32
        $region31: #{tpu_custom_call.1} parent=11 // pred_region
          _
        $region32: #{tpu_custom_call.1} parent=11 // pred_fallthru
          _
        // Predicated region
        $region33: #{tpu_custom_call.1} parent=11 // pred_check
          %p327 = pneg %p230
        $region34: #{tpu_custom_call.1} parent=11 // pred_check_branch
          %329 = sbr.rel (%p327) target = $region36
        $region35: #{tpu_custom_call.1} parent=11 // pred_region
          _
        $region36: #{tpu_custom_call.1} parent=11 // pred_fallthru
          _
        // Predicated region
        $region37: #{tpu_custom_call.1} parent=11 // pred_check
          %p330 = pneg %p251
        $region38: #{tpu_custom_call.1} parent=11 // pred_check_branch
          %332 = sbr.rel (%p330) target = $region40
        $region39: #{tpu_custom_call.1} parent=11 // pred_region
          _
        $region40: #{tpu_custom_call.1} parent=11 // pred_fallthru
          _
      $region12: #{tpu_custom_call.1} parent=5 // pred_fallthru
        _
      %p333 = scmp.lt.s32.totalorder %s26, 2
      // Predicated region
      $region41: #{tpu_custom_call.1} parent=5 // pred_check
        %p334 = pneg %p333
      $region42: #{tpu_custom_call.1} parent=5 // pred_check_branch
        %336 = sbr.rel (%p334) target = $region44
      $region43: #{tpu_custom_call.1} parent=5 // pred_region
        // Predicated region
        $region45: #{tpu_custom_call.1} parent=43 // pred_check
          %p337 = pneg %p46
        $region46: #{tpu_custom_call.1} parent=43 // pred_check_branch
          %339 = sbr.rel (%p337) target = $region48
        $region47: #{tpu_custom_call.1} parent=43 // pred_region
          %s340 = sand.u32 %s36, 1
          %s341 = scalar_lea.sflag [#allocation3], %s340
          %s342 = sand.u32 %s36, 1
          %s343 = smul.addr %s342, 8
          %s344 = scalar_lea.vmem [#allocation2], %s343
          %s346 = ssub.s32 128, 128
          %347 = vsyncadd %s341, %s346
          %s348 = smul.addr %s26, 128
          %s349 = scalar_lea.hbm %s0, %s348
          %s351 = sshll.u32 %s344, 4
          %s352 = int_to_ptr.vmem [resolvable:$true] %s351
          %354 = dma.hbm_to_vmem [thread:$0]  %s349, 128, %s352, %s341
        $region48: #{tpu_custom_call.1} parent=43 // pred_fallthru
          _
        // Predicated region
        $region49: #{tpu_custom_call.1} parent=43 // pred_check
          %p355 = pneg %p72
        $region50: #{tpu_custom_call.1} parent=43 // pred_check_branch
          %357 = sbr.rel (%p355) target = $region52
        $region51: #{tpu_custom_call.1} parent=43 // pred_region
          %s358 = sand.u32 %s26, 1
          %s359 = scalar_lea.sflag [#allocation6], %s358
          %s360 = sand.u32 %s62, 1
          %s361 = smul.addr %s360, 8
          %s362 = scalar_lea.vmem [#allocation5], %s361
          %s364 = ssub.s32 128, 128
          %365 = vsyncadd %s359, %s364
          %s366 = smul.addr %s26, 128
          %s367 = scalar_lea.hbm %s1, %s366
          %s369 = sshll.u32 %s362, 4
          %s370 = int_to_ptr.vmem [resolvable:$true] %s369
          %372 = dma.hbm_to_vmem [thread:$0]  %s367, 128, %s370, %s359
        $region52: #{tpu_custom_call.1} parent=43 // pred_fallthru
          _
        // Predicated region
        $region53: #{tpu_custom_call.1} parent=43 // pred_check
          %p373 = pneg %p98
        $region54: #{tpu_custom_call.1} parent=43 // pred_check_branch
          %375 = sbr.rel (%p373) target = $region56
        $region55: #{tpu_custom_call.1} parent=43 // pred_region
          %s376 = sand.u32 %s26, 1
          %s377 = scalar_lea.sflag [#allocation6], %s376
          %s378 = sand.u32 %s88, 1
          %s379 = smul.addr %s378, 8
          %s380 = scalar_lea.vmem [#allocation7], %s379
          %s382 = ssub.s32 128, 128
          %383 = vsyncadd %s377, %s382
          %s384 = smul.addr %s26, 128
          %s385 = scalar_lea.hbm %s2, %s384
          %s387 = sshll.u32 %s380, 4
          %s388 = int_to_ptr.vmem [resolvable:$true] %s387
          %390 = dma.hbm_to_vmem [thread:$0]  %s385, 128, %s388, %s377
        $region56: #{tpu_custom_call.1} parent=43 // pred_fallthru
          _
      $region44: #{tpu_custom_call.1} parent=5 // pred_fallthru
        _
      %p391 = scmp.le.s32.totalorder 1, %s26
      %p392 = scmp.lt.s32.totalorder %s26, 3
      %p393 = pnand %p391, %p392
      %p394 = pneg %p393
      // Predicated region
      $region57: #{tpu_custom_call.1} parent=5 // pred_check
        _
      $region58: #{tpu_custom_call.1} parent=5 // pred_check_branch
        %396 = sbr.rel (%p393) target = $region60
      $region59: #{tpu_custom_call.1} parent=5 // pred_region
        %s397 = ssub.s32 %s26, 1
        %s398 = sand.u32 %s39, 1
        %s399 = scalar_lea.sflag [#allocation3], %s398
        %s400 = sand.u32 %s39, 1
        %s401 = smul.addr %s400, 8
        %s402 = scalar_lea.vmem [#allocation2], %s401
        // Predicated region
        $region61: #{tpu_custom_call.1} parent=59 // pred_check
          %p403 = pneg %p52
        $region62: #{tpu_custom_call.1} parent=59 // pred_check_branch
          %405 = sbr.rel (%p403) target = $region64
        $region63: #{tpu_custom_call.1} parent=59 // pred_region
          %406 = dma.done %s399, 128
        $region64: #{tpu_custom_call.1} parent=59 // pred_fallthru
          _
        %s407 = sand.u32 %s31, 1
        %s408 = scalar_lea.sflag [#allocation6], %s407
        %s409 = sand.u32 %s65, 1
        %s410 = smul.addr %s409, 8
        %s411 = scalar_lea.vmem [#allocation5], %s410
        // Predicated region
        $region65: #{tpu_custom_call.1} parent=59 // pred_check
          %p412 = pneg %p78
        $region66: #{tpu_custom_call.1} parent=59 // pred_check_branch
          %414 = sbr.rel (%p412) target = $region68
        $region67: #{tpu_custom_call.1} parent=59 // pred_region
          %415 = dma.done %s408, 128
        $region68: #{tpu_custom_call.1} parent=59 // pred_fallthru
          _
        %s416 = sand.u32 %s31, 1
        %s417 = scalar_lea.sflag [#allocation6], %s416
        %s418 = sand.u32 %s91, 1
        %s419 = smul.addr %s418, 8
        %s420 = scalar_lea.vmem [#allocation7], %s419
        // Predicated region
        $region69: #{tpu_custom_call.1} parent=59 // pred_check
          %p421 = pneg %p104
        $region70: #{tpu_custom_call.1} parent=59 // pred_check_branch
          %423 = sbr.rel (%p421) target = $region72
        $region71: #{tpu_custom_call.1} parent=59 // pred_region
          %424 = dma.done %s417, 128
        $region72: #{tpu_custom_call.1} parent=59 // pred_fallthru
          _
        // Predicated region
        $region73: #{tpu_custom_call.1} parent=59 // pred_check
          %p425 = pneg %p146
        $region74: #{tpu_custom_call.1} parent=59 // pred_check_branch
          %427 = sbr.rel (%p425) target = $region76
        $region75: #{tpu_custom_call.1} parent=59 // pred_region
          %428 = dma.done [#allocation9], 256
        $region76: #{tpu_custom_call.1} parent=59 // pred_fallthru
          _
        // Predicated region
        $region77: #{tpu_custom_call.1} parent=59 // pred_check
          %p429 = pneg %p167
        $region78: #{tpu_custom_call.1} parent=59 // pred_check_branch
          %431 = sbr.rel (%p429) target = $region80
        $region79: #{tpu_custom_call.1} parent=59 // pred_region
          %432 = dma.done [#allocation9], 256
        $region80: #{tpu_custom_call.1} parent=59 // pred_fallthru
          _
        %s433 = sand.u32 %s39, 1
        %s434 = scalar_lea.sflag [#allocation3], %s433
        %s435 = sand.u32 %s39, 1
        %s436 = smul.addr %s435, 8
        %s437 = scalar_lea.vmem [#allocation2], %s436
        %p438 = pneg %p52
        %p439 = pneg %p49
        %s440 = sand.u32 %s31, 1
        %s441 = scalar_lea.sflag [#allocation6], %s440
        %s442 = sand.u32 %s65, 1
        %s443 = smul.addr %s442, 8
        %s444 = scalar_lea.vmem [#allocation5], %s443
        %p445 = pneg %p78
        %p446 = pneg %p75
        %s447 = sand.u32 %s31, 1
        %s448 = scalar_lea.sflag [#allocation6], %s447
        %s449 = sand.u32 %s91, 1
        %s450 = smul.addr %s449, 8
        %s451 = scalar_lea.vmem [#allocation7], %s450
        %p452 = pneg %p104
        %p453 = pneg %p101
        %p454 = pneg %p125
        %p455 = pneg %p122
        %p456 = pneg %p146
        %p457 = pneg %p143
        %p458 = pneg %p167
        %p459 = pneg %p164
        %p460 = pneg %p188
        %p461 = pneg %p185
        %p462 = pneg %p209
        %p463 = pneg %p206
        %p464 = pneg %p230
        %p465 = pneg %p227
        %p466 = pneg %p251
        %p467 = pneg %p248
        %p468 = pneg %p277
        %p469 = pneg %p274
        %s470 = sand.u32 %s264, 1
        %s471 = scalar_lea.sflag [#allocation4], %s470
        %s472 = sand.u32 %s264, 1
        %s473 = smul.addr %s472, 8
        %s474 = scalar_lea.vmem [#allocation11], %s473
        %v475 = vld [vmem:[%s402] sm:$0xff]
        %v476 = vld [vmem:[%s3] sm:$0xff]
        %v477 = vld [vmem:[%s3 + $0x8] sm:$0xff]
        %v478 = vld [vmem:[%s3 + $0x10] sm:$0xff]
        %v479 = vld [vmem:[%s3 + $0x18] sm:$0xff]
        %v480 = vld [vmem:[%s411] sm:$0xff]
        %v481 = vld [vmem:[#allocation8] sm:$0xff]
        %v482 = vld [vmem:[#allocation8 + $0x8] sm:$0xff]
        %vm483 = vcmask 130048
        %v485 = vsel %vm483, %v480, 0
        %487 = vmatprep.subr.mxu0 0.0
        %488 = vmatpush1.msra.mxu0 0.0
        %489 = vmatprep.subr.mxu0 0.0
        %490 = vmatpush1.msra.mxu0 0.0
        %491 = vmatprep.subr.mxu0 0.0
        %492 = vmatpush1.msra.mxu0 0.0
        %493 = vmatprep.subr.mxu0 0.0
        %494 = vmatpush1.msra.mxu0 0.0
        %495 = vmatprep.subr.mxu0 0.0
        %496 = vmatpush1.msra.mxu0 0.0
        %497 = vmatprep.subr.mxu0 0.0
        %498 = vmatpush1.msra.mxu0 0.0
        %499 = vmatprep.subr.mxu0 0.0
        %500 = vmatpush1.msra.mxu0 0.0
        %501 = vmatprep.subr.mxu0 0.0
        %502 = vmatpush1.msra.mxu0 0.0
        %503 = vmatprep.subr.mxu0 0.0
        %504 = vmatpush1.msra.mxu0 0.0
        %505 = vmatprep.subr.mxu0 0.0
        %506 = vmatpush1.msra.mxu0 0.0
        %507 = vmatprep.subr.mxu0 0.0
        %508 = vmatpush1.msra.mxu0 0.0
        %509 = vmatprep.subr.mxu0 0.0
        %510 = vmatpush1.msra.mxu0 0.0
        %511 = vmatprep.subr.mxu0 0.0
        %512 = vmatpush1.msra.mxu0 0.0
        %513 = vmatprep.subr.mxu0 0.0
        %514 = vmatpush1.msra.mxu0 0.0
        %515 = vmatprep.subr.mxu0 0.0
        %516 = vmatpush1.msra.mxu0 %v482
        %517 = vmatprep.subr.mxu0 0.0
        %518 = vmatpush1.msra.mxu0 %v481
        %519 = vmatprep.subr.mxu0 0.0
        %520 = vmatpush2.msra.mxu0 0.0
        %521 = vmatprep.subr.mxu0 0.0
        %522 = vmatpush2.msra.mxu0 0.0
        %523 = vmatprep.subr.mxu0 0.0
        %524 = vmatpush2.msra.mxu0 0.0
        %525 = vmatprep.subr.mxu0 0.0
        %526 = vmatpush2.msra.mxu0 0.0
        %527 = vmatprep.subr.mxu0 0.0
        %528 = vmatpush2.msra.mxu0 0.0
        %529 = vmatprep.subr.mxu0 0.0
        %530 = vmatpush2.msra.mxu0 0.0
        %531 = vmatprep.subr.mxu0 0.0
        %532 = vmatpush2.msra.mxu0 0.0
        %533 = vmatprep.subr.mxu0 0.0
        %534 = vmatpush2.msra.mxu0 0.0
        %535 = vmatprep.subr.mxu0 0.0
        %536 = vmatpush2.msra.mxu0 0.0
        %537 = vmatprep.subr.mxu0 0.0
        %538 = vmatpush2.msra.mxu0 0.0
        %539 = vmatprep.subr.mxu0 0.0
        %540 = vmatpush2.msra.mxu0 0.0
        %541 = vmatprep.subr.mxu0 0.0
        %542 = vmatpush2.msra.mxu0 0.0
        %543 = vmatprep.subr.mxu0 0.0
        %544 = vmatpush2.msra.mxu0 0.0
        %545 = vmatprep.subr.mxu0 0.0
        %546 = vmatpush2.msra.mxu0 0.0
        %547 = vmatprep.subr.mxu0 0.0
        %548 = vmatpush2.msra.mxu0 0.0
        %549 = vmatprep.subr.mxu0 0.0
        %550 = vmatpush2.msra.mxu0 0.0
        %551 = vmatprep.mubr.f32.mxu0 0.0
        %552 = vmatmul.mubr.f32.gmra.mxu0 %v485
        %v553 = vpop.f32.mrf.mxu0
        %v554 = vadd.f32 0.0, %v553
        %v555 = vpop.f32.mrf.mxu0
        %556 = vdwg.mxu0
        %vm557 = vcmask 261120
        %v559 = vsel %vm557, %v475, 0
        %561 = vmatprep.subr.mxu0 0.0
        %562 = vmatpush1.msra.mxu0 0.0
        %563 = vmatprep.subr.mxu0 0.0
        %564 = vmatpush1.msra.mxu0 0.0
        %565 = vmatprep.subr.mxu0 0.0
        %566 = vmatpush1.msra.mxu0 0.0
        %567 = vmatprep.subr.mxu0 0.0
        %568 = vmatpush1.msra.mxu0 0.0
        %569 = vmatprep.subr.mxu0 0.0
        %570 = vmatpush1.msra.mxu0 0.0
        %571 = vmatprep.subr.mxu0 0.0
        %572 = vmatpush1.msra.mxu0 0.0
        %573 = vmatprep.subr.mxu0 0.0
        %574 = vmatpush1.msra.mxu0 0.0
        %575 = vmatprep.subr.mxu0 0.0
        %576 = vmatpush1.msra.mxu0 0.0
        %577 = vmatprep.subr.mxu0 0.0
        %578 = vmatpush1.msra.mxu0 0.0
        %579 = vmatprep.subr.mxu0 0.0
        %580 = vmatpush1.msra.mxu0 0.0
        %581 = vmatprep.subr.mxu0 0.0
        %582 = vmatpush1.msra.mxu0 0.0
        %583 = vmatprep.subr.mxu0 0.0
        %584 = vmatpush1.msra.mxu0 0.0
        %585 = vmatprep.subr.mxu0 0.0
        %586 = vmatpush1.msra.mxu0 %v479
        %587 = vmatprep.subr.mxu0 0.0
        %588 = vmatpush1.msra.mxu0 %v478
        %589 = vmatprep.subr.mxu0 0.0
        %590 = vmatpush1.msra.mxu0 %v477
        %591 = vmatprep.subr.mxu0 0.0
        %592 = vmatpush1.msra.mxu0 %v476
        %593 = vmatprep.subr.mxu0 0.0
        %594 = vmatpush2.msra.mxu0 0.0
        %595 = vmatprep.subr.mxu0 0.0
        %596 = vmatpush2.msra.mxu0 0.0
        %597 = vmatprep.subr.mxu0 0.0
        %598 = vmatpush2.msra.mxu0 0.0
        %599 = vmatprep.subr.mxu0 0.0
        %600 = vmatpush2.msra.mxu0 0.0
        %601 = vmatprep.subr.mxu0 0.0
        %602 = vmatpush2.msra.mxu0 0.0
        %603 = vmatprep.subr.mxu0 0.0
        %604 = vmatpush2.msra.mxu0 0.0
        %605 = vmatprep.subr.mxu0 0.0
        %606 = vmatpush2.msra.mxu0 0.0
        %607 = vmatprep.subr.mxu0 0.0
        %608 = vmatpush2.msra.mxu0 0.0
        %609 = vmatprep.subr.mxu0 0.0
        %610 = vmatpush2.msra.mxu0 0.0
        %611 = vmatprep.subr.mxu0 0.0
        %612 = vmatpush2.msra.mxu0 0.0
        %613 = vmatprep.subr.mxu0 0.0
        %614 = vmatpush2.msra.mxu0 0.0
        %615 = vmatprep.subr.mxu0 0.0
        %616 = vmatpush2.msra.mxu0 0.0
        %617 = vmatprep.subr.mxu0 0.0
        %618 = vmatpush2.msra.mxu0 0.0
        %619 = vmatprep.subr.mxu0 0.0
        %620 = vmatpush2.msra.mxu0 0.0
        %621 = vmatprep.subr.mxu0 0.0
        %622 = vmatpush2.msra.mxu0 0.0
        %623 = vmatprep.subr.mxu0 0.0
        %624 = vmatpush2.msra.mxu0 0.0
        %625 = vmatprep.mubr.f32.mxu0 0.0
        %626 = vmatmul.mubr.f32.gmra.mxu0 %v559
        %v627 = vpop.f32.mrf.mxu0
        %v628 = vadd.f32 %v554, %v627
        %v629 = vpop.f32.mrf.mxu0
        %630 = vdwg.mxu0
        %v631 = vld [vmem:[%s420] sm:$0xff]
        %v632 = vld [vmem:[#allocation10] sm:$0xff]
        %v633 = vld [vmem:[#allocation10 + $0x8] sm:$0xff]
        %v635 = vsel %vm483, %v631, 0
        %637 = vmatprep.subr.mxu0 0.0
        %638 = vmatpush1.msra.mxu0 0.0
        %639 = vmatprep.subr.mxu0 0.0
        %640 = vmatpush1.msra.mxu0 0.0
        %641 = vmatprep.subr.mxu0 0.0
        %642 = vmatpush1.msra.mxu0 0.0
        %643 = vmatprep.subr.mxu0 0.0
        %644 = vmatpush1.msra.mxu0 0.0
        %645 = vmatprep.subr.mxu0 0.0
        %646 = vmatpush1.msra.mxu0 0.0
        %647 = vmatprep.subr.mxu0 0.0
        %648 = vmatpush1.msra.mxu0 0.0
        %649 = vmatprep.subr.mxu0 0.0
        %650 = vmatpush1.msra.mxu0 0.0
        %651 = vmatprep.subr.mxu0 0.0
        %652 = vmatpush1.msra.mxu0 0.0
        %653 = vmatprep.subr.mxu0 0.0
        %654 = vmatpush1.msra.mxu0 0.0
        %655 = vmatprep.subr.mxu0 0.0
        %656 = vmatpush1.msra.mxu0 0.0
        %657 = vmatprep.subr.mxu0 0.0
        %658 = vmatpush1.msra.mxu0 0.0
        %659 = vmatprep.subr.mxu0 0.0
        %660 = vmatpush1.msra.mxu0 0.0
        %661 = vmatprep.subr.mxu0 0.0
        %662 = vmatpush1.msra.mxu0 0.0
        %663 = vmatprep.subr.mxu0 0.0
        %664 = vmatpush1.msra.mxu0 0.0
        %665 = vmatprep.subr.mxu0 0.0
        %666 = vmatpush1.msra.mxu0 %v633
        %667 = vmatprep.subr.mxu0 0.0
        %668 = vmatpush1.msra.mxu0 %v632
        %669 = vmatprep.subr.mxu0 0.0
        %670 = vmatpush2.msra.mxu0 0.0
        %671 = vmatprep.subr.mxu0 0.0
        %672 = vmatpush2.msra.mxu0 0.0
        %673 = vmatprep.subr.mxu0 0.0
        %674 = vmatpush2.msra.mxu0 0.0
        %675 = vmatprep.subr.mxu0 0.0
        %676 = vmatpush2.msra.mxu0 0.0
        %677 = vmatprep.subr.mxu0 0.0
        %678 = vmatpush2.msra.mxu0 0.0
        %679 = vmatprep.subr.mxu0 0.0
        %680 = vmatpush2.msra.mxu0 0.0
        %681 = vmatprep.subr.mxu0 0.0
        %682 = vmatpush2.msra.mxu0 0.0
        %683 = vmatprep.subr.mxu0 0.0
        %684 = vmatpush2.msra.mxu0 0.0
        %685 = vmatprep.subr.mxu0 0.0
        %686 = vmatpush2.msra.mxu0 0.0
        %687 = vmatprep.subr.mxu0 0.0
        %688 = vmatpush2.msra.mxu0 0.0
        %689 = vmatprep.subr.mxu0 0.0
        %690 = vmatpush2.msra.mxu0 0.0
        %691 = vmatprep.subr.mxu0 0.0
        %692 = vmatpush2.msra.mxu0 0.0
        %693 = vmatprep.subr.mxu0 0.0
        %694 = vmatpush2.msra.mxu0 0.0
        %695 = vmatprep.subr.mxu0 0.0
        %696 = vmatpush2.msra.mxu0 0.0
        %697 = vmatprep.subr.mxu0 0.0
        %698 = vmatpush2.msra.mxu0 0.0
        %699 = vmatprep.subr.mxu0 0.0
        %700 = vmatpush2.msra.mxu0 0.0
        %701 = vmatprep.mubr.f32.mxu0 0.0
        %702 = vmatmul.mubr.f32.gmra.mxu0 %v635
        %v703 = vpop.f32.mrf.mxu0
        %v704 = vadd.f32 0.0, %v703
        %v705 = vpop.f32.mrf.mxu0
        %706 = vdwg.mxu0
        %v707 = vadd.f32 %v628, %v704
        %v708 = vld [vmem:[%s6] sm:$0x1]
        %v710 = vlaneseq
        %v711 = vshrl.u32 %v710, 7
        %v712 = vsub.s32 0, %v711
        %v713 = vrot.slane %v708, %v712
        %v715 = vadd.f32 %v707, %v713
        %vm716 = vcmask 392192
        %v717 = vsel %vm716, %v715, -inf
        %718 = vmax.xlane.f32.xlu0 %v717
        %v719 = vpop.xlane.xlu0 %718
        %v720 = vsub.f32 %v715, %v719
        %v721 = vmul.f32 %v720, 1.442695
        %v722 = vpow.pop %v721
        %v723 = vld [vmem:[%s7] sm:$0xff]
        %v724 = vld [vmem:[%s7 + $0x8] sm:$0xff]
        %v725 = vld [vmem:[%s7 + $0x10] sm:$0xff]
        %v726 = vld [vmem:[%s7 + $0x18] sm:$0xff]
        %v727 = vld [vmem:[%s7 + $0x20] sm:$0xff]
        %v728 = vld [vmem:[%s7 + $0x28] sm:$0xff]
        %v730 = vsel %vm716, %v722, 0
        %732 = vmatprep.subr.mxu0 0.0
        %733 = vmatpush1.msra.mxu0 0.0
        %734 = vmatprep.subr.mxu0 0.0
        %735 = vmatpush1.msra.mxu0 0.0
        %736 = vmatprep.subr.mxu0 0.0
        %737 = vmatpush1.msra.mxu0 0.0
        %738 = vmatprep.subr.mxu0 0.0
        %739 = vmatpush1.msra.mxu0 0.0
        %740 = vmatprep.subr.mxu0 0.0
        %741 = vmatpush1.msra.mxu0 0.0
        %742 = vmatprep.subr.mxu0 0.0
        %743 = vmatpush1.msra.mxu0 0.0
        %744 = vmatprep.subr.mxu0 0.0
        %745 = vmatpush1.msra.mxu0 0.0
        %746 = vmatprep.subr.mxu0 0.0
        %747 = vmatpush1.msra.mxu0 0.0
        %748 = vmatprep.subr.mxu0 0.0
        %749 = vmatpush1.msra.mxu0 0.0
        %750 = vmatprep.subr.mxu0 0.0
        %751 = vmatpush1.msra.mxu0 0.0
        %752 = vmatprep.subr.mxu0 0.0
        %753 = vmatpush1.msra.mxu0 %v728
        %754 = vmatprep.subr.mxu0 0.0
        %755 = vmatpush1.msra.mxu0 %v727
        %756 = vmatprep.subr.mxu0 0.0
        %757 = vmatpush1.msra.mxu0 %v726
        %758 = vmatprep.subr.mxu0 0.0
        %759 = vmatpush1.msra.mxu0 %v725
        %760 = vmatprep.subr.mxu0 0.0
        %761 = vmatpush1.msra.mxu0 %v724
        %762 = vmatprep.subr.mxu0 0.0
        %763 = vmatpush1.msra.mxu0 %v723
        %764 = vmatprep.subr.mxu0 0.0
        %765 = vmatpush2.msra.mxu0 0.0
        %766 = vmatprep.subr.mxu0 0.0
        %767 = vmatpush2.msra.mxu0 0.0
        %768 = vmatprep.subr.mxu0 0.0
        %769 = vmatpush2.msra.mxu0 0.0
        %770 = vmatprep.subr.mxu0 0.0
        %771 = vmatpush2.msra.mxu0 0.0
        %772 = vmatprep.subr.mxu0 0.0
        %773 = vmatpush2.msra.mxu0 0.0
        %774 = vmatprep.subr.mxu0 0.0
        %775 = vmatpush2.msra.mxu0 0.0
        %776 = vmatprep.subr.mxu0 0.0
        %777 = vmatpush2.msra.mxu0 0.0
        %778 = vmatprep.subr.mxu0 0.0
        %779 = vmatpush2.msra.mxu0 0.0
        %780 = vmatprep.subr.mxu0 0.0
        %781 = vmatpush2.msra.mxu0 0.0
        %782 = vmatprep.subr.mxu0 0.0
        %783 = vmatpush2.msra.mxu0 0.0
        %784 = vmatprep.subr.mxu0 0.0
        %785 = vmatpush2.msra.mxu0 0.0
        %786 = vmatprep.subr.mxu0 0.0
        %787 = vmatpush2.msra.mxu0 0.0
        %788 = vmatprep.subr.mxu0 0.0
        %789 = vmatpush2.msra.mxu0 0.0
        %790 = vmatprep.subr.mxu0 0.0
        %791 = vmatpush2.msra.mxu0 0.0
        %792 = vmatprep.subr.mxu0 0.0
        %793 = vmatpush2.msra.mxu0 0.0
        %794 = vmatprep.subr.mxu0 0.0
        %795 = vmatpush2.msra.mxu0 0.0
        %796 = vmatprep.mubr.f32.mxu0 0.0
        %797 = vmatmul.mubr.f32.gmra.mxu0 %v730
        %v798 = vpop.f32.mrf.mxu0
        %v799 = vadd.f32 0.0, %v798
        %v800 = vpop.f32.mrf.mxu0
        %801 = vdwg.mxu0
        %v802 = vmax.f32 %v799, 1e-30
        %v803 = vrcp.pop %v802
        %v804 = vmul.f32 %v722, %v803
        %v805 = vld [vmem:[%s9] sm:$0x7]
        %v806 = vld [vmem:[%s8] sm:$0xff]
        %v807 = vld [vmem:[%s8 + $0x8] sm:$0xff]
        %v808 = vld [vmem:[%s8 + $0x10] sm:$0xff]
        %v809 = vld [vmem:[%s8 + $0x18] sm:$0xff]
        %v810 = vld [vmem:[%s8 + $0x20] sm:$0xff]
        %v811 = vld [vmem:[%s8 + $0x28] sm:$0xff]
        %v812 = vlaneseq
        %v813 = vshrl.u32 %v812, 7
        %v814 = vsub.s32 0, %v813
        %v815 = vrot.slane %v805, %v814
        %v817 = vsel %vm716, %v804, 0
        %819 = vmatprep.subr.mxu0 0.0
        %820 = vmatpush1.msra.mxu0 0.0
        %821 = vmatprep.subr.mxu0 0.0
        %822 = vmatpush1.msra.mxu0 0.0
        %823 = vmatprep.subr.mxu0 0.0
        %824 = vmatpush1.msra.mxu0 0.0
        %825 = vmatprep.subr.mxu0 0.0
        %826 = vmatpush1.msra.mxu0 0.0
        %827 = vmatprep.subr.mxu0 0.0
        %828 = vmatpush1.msra.mxu0 0.0
        %829 = vmatprep.subr.mxu0 0.0
        %830 = vmatpush1.msra.mxu0 0.0
        %831 = vmatprep.subr.mxu0 0.0
        %832 = vmatpush1.msra.mxu0 0.0
        %833 = vmatprep.subr.mxu0 0.0
        %834 = vmatpush1.msra.mxu0 0.0
        %835 = vmatprep.subr.mxu0 0.0
        %836 = vmatpush1.msra.mxu0 0.0
        %837 = vmatprep.subr.mxu0 0.0
        %838 = vmatpush1.msra.mxu0 0.0
        %839 = vmatprep.subr.mxu0 0.0
        %840 = vmatpush1.msra.mxu0 %v811
        %841 = vmatprep.subr.mxu0 0.0
        %842 = vmatpush1.msra.mxu0 %v810
        %843 = vmatprep.subr.mxu0 0.0
        %844 = vmatpush1.msra.mxu0 %v809
        %845 = vmatprep.subr.mxu0 0.0
        %846 = vmatpush1.msra.mxu0 %v808
        %847 = vmatprep.subr.mxu0 0.0
        %848 = vmatpush1.msra.mxu0 %v807
        %849 = vmatprep.subr.mxu0 0.0
        %850 = vmatpush1.msra.mxu0 %v806
        %851 = vmatprep.subr.mxu0 0.0
        %852 = vmatpush2.msra.mxu0 0.0
        %853 = vmatprep.subr.mxu0 0.0
        %854 = vmatpush2.msra.mxu0 0.0
        %855 = vmatprep.subr.mxu0 0.0
        %856 = vmatpush2.msra.mxu0 0.0
        %857 = vmatprep.subr.mxu0 0.0
        %858 = vmatpush2.msra.mxu0 0.0
        %859 = vmatprep.subr.mxu0 0.0
        %860 = vmatpush2.msra.mxu0 0.0
        %861 = vmatprep.subr.mxu0 0.0
        %862 = vmatpush2.msra.mxu0 0.0
        %863 = vmatprep.subr.mxu0 0.0
        %864 = vmatpush2.msra.mxu0 0.0
        %865 = vmatprep.subr.mxu0 0.0
        %866 = vmatpush2.msra.mxu0 0.0
        %867 = vmatprep.subr.mxu0 0.0
        %868 = vmatpush2.msra.mxu0 0.0
        %869 = vmatprep.subr.mxu0 0.0
        %870 = vmatpush2.msra.mxu0 0.0
        %871 = vmatprep.subr.mxu0 0.0
        %872 = vmatpush2.msra.mxu0 0.0
        %873 = vmatprep.subr.mxu0 0.0
        %874 = vmatpush2.msra.mxu0 0.0
        %875 = vmatprep.subr.mxu0 0.0
        %876 = vmatpush2.msra.mxu0 0.0
        %877 = vmatprep.subr.mxu0 0.0
        %878 = vmatpush2.msra.mxu0 0.0
        %879 = vmatprep.subr.mxu0 0.0
        %880 = vmatpush2.msra.mxu0 0.0
        %881 = vmatprep.subr.mxu0 0.0
        %882 = vmatpush2.msra.mxu0 0.0
        %883 = vmatprep.mubr.f32.mxu0 0.0
        %884 = vmatmul.mubr.f32.gmra.mxu0 %v817
        %v885 = vpop.f32.mrf.mxu0
        %v886 = vadd.f32 %v815, %v885
        %v887 = vpop.f32.mrf.mxu0
        %888 = vdwg.mxu0
        %v889 = vadd.f32 %v886, %v475
        %v890 = vsel %vm557, %v889, 0.0
        %891 = vadd.xlane.f32.xlu0 %v890
        %v892 = vpop.xlane.xlu0 %891
        %v893 = vrcp.pop 32.0
        %v894 = vmul.f32 %v892, %v893
        %v895 = vsub.f32 %v889, %v894
        %v896 = vmul.f32 %v895, %v895
        %v897 = vsel %vm557, %v896, 0.0
        %898 = vadd.xlane.f32.xlu0 %v897
        %v899 = vpop.xlane.xlu0 %898
        %v900 = vmul.f32 %v899, %v893
        %v901 = vadd.f32 %v900, 1e-05
        %v902 = vrsqrt.pop %v901
        %v903 = vmul.f32 %v895, %v902
        %v904 = vlaneseq
        %v905 = vshrl.u32 %v904, 7
        %v906 = vsub.s32 1, %v905
        %v907 = vrot.slane %v805, %v906
        %v908 = vmul.f32 %v903, %v907
        %v909 = vlaneseq
        %v910 = vshrl.u32 %v909, 7
        %v911 = vsub.s32 2, %v910
        %v912 = vrot.slane %v805, %v911
        %v913 = vadd.f32 %v908, %v912
        %914 = vst.msk [vmem:[%s474] sm:$0xff] %vm557, %v913
        %s915 = sand.u32 %s264, 1
        %s916 = scalar_lea.sflag [#allocation4], %s915
        %s917 = sand.u32 %s264, 1
        %s918 = smul.addr %s917, 8
        %s919 = scalar_lea.vmem [#allocation11], %s918
        // Predicated region
        $region81: #{tpu_custom_call.1} parent=59 // pred_check
          %p920 = pneg %p274
        $region82: #{tpu_custom_call.1} parent=59 // pred_check_branch
          %922 = sbr.rel (%p920) target = $region84
        $region83: #{tpu_custom_call.1} parent=59 // pred_region
          %s924 = ssub.s32 128, 128
          %925 = vsyncadd %s916, %s924
          %s926 = smul.addr %s31, 128
          %s927 = scalar_lea.hbm %s10, %s926
          %s929 = sshll.u32 %s919, 4
          %s930 = int_to_ptr.vmem [resolvable:$true] %s929
          %932 = dma.vmem_to_hbm [thread:$0]  %s930, 128, %s927, %s916
        $region84: #{tpu_custom_call.1} parent=59 // pred_fallthru
          _
      $region60: #{tpu_custom_call.1} parent=5 // pred_fallthru
        _
      %p933 = scmp.le.s32.totalorder 2, %s26
      // Predicated region
      $region85: #{tpu_custom_call.1} parent=5 // pred_check
        %p934 = pneg %p933
      $region86: #{tpu_custom_call.1} parent=5 // pred_check_branch
        %936 = sbr.rel (%p934) target = $region88
      $region87: #{tpu_custom_call.1} parent=5 // pred_region
        %s937 = ssub.s32 %s26, 2
        // Predicated region
        $region89: #{tpu_custom_call.1} parent=87 // pred_check
          %p938 = pneg %p280
        $region90: #{tpu_custom_call.1} parent=87 // pred_check_branch
          %940 = sbr.rel (%p938) target = $region92
        $region91: #{tpu_custom_call.1} parent=87 // pred_region
          %s941 = sand.u32 %s265, 1
          %s942 = scalar_lea.sflag [#allocation4], %s941
          %s943 = sand.u32 %s265, 1
          %s944 = smul.addr %s943, 8
          %s945 = scalar_lea.vmem [#allocation11], %s944
          %946 = dma.done %s942, 128
        $region92: #{tpu_custom_call.1} parent=87 // pred_fallthru
          _
      $region88: #{tpu_custom_call.1} parent=5 // pred_fallthru
        _
    $region6: #{tpu_custom_call.1} parent=1 // loop_footer
      %s30 = sadd.s32 1, %s26
    $region7: #{tpu_custom_call.1} parent=1 // loop_footer_branch
      %25 = sbr.rel target = $region3
    $region8: #{tpu_custom_call.1} parent=1 // loop_exit
      _
    %947 = vsyncpa [#allocation3], 1
    %s948 = scalar_lea.sflag [#allocation3], 1
    %949 = vsyncpa %s948, 1
    %950 = vsyncpa [#allocation6], 1
    %s951 = scalar_lea.sflag [#allocation6], 1
    %952 = vsyncpa %s951, 1
    %953 = vsyncpa [#allocation9], 1
    %954 = vsyncpa [#allocation4], 1
    %s955 = scalar_lea.sflag [#allocation4], 1
    %956 = vsyncpa %s955, 1

</llo_original>
